<compile_context>
chip_gen: v7x
topology: tpu7x:2x2x1
jax: 0.10.0
libtpu: 0.0.40
codegen_flags: <defaults>
</compile_context>

<pallas_src>
import functools
import math

import jax
import jax.numpy as jnp
from jax import lax
from jax.experimental import pallas as pl
from jax.experimental.pallas import tpu as pltpu

DROPOUT_P = 0.1
HIDDEN = 256          # module's hidden_size; multiple of 128 => lane-dense blocks
MAX_LEN = 5000

# Keep the double-buffered footprint of (x block + out block + pe block) under
# this budget.  24 MiB fits the 32 MiB scoped VMEM default on v6e/v7x (and well
# under v7x's 64 MiB physical); vmem_limit_bytes below lifts v5e's 16 MiB
# scoped default so the larger tiles are actually usable there too.
_VMEM_BUDGET_BYTES = 24 * 1024 * 1024
_VMEM_LIMIT_BYTES = 32 * 1024 * 1024


def build_pe(max_len: int, hidden: int) -> jnp.ndarray:
    """Replicates the PyTorch buffer: pe of shape (max_len, 1, hidden)."""
    position = jnp.arange(0, max_len, dtype=jnp.float32)[:, None]           # (L, 1)
    div_term = jnp.exp(
        jnp.arange(0, hidden, 2, dtype=jnp.float32) * (-math.log(10000.0) / hidden)
    )                                                                        # (H/2,)
    ang = position * div_term                                                # (L, H/2)
    pe = jnp.zeros((max_len, hidden), dtype=jnp.float32)
    pe = pe.at[:, 0::2].set(jnp.sin(ang))
    pe = pe.at[:, 1::2].set(jnp.cos(ang))
    return pe[:, None, :]                                                    # (L, 1, H)


def _hash_u32(x):
    """32-bit avalanche mix (murmur3/splitmix-style finalizer) — pure VPU int ops."""
    x = x ^ (x >> 16)
    x = x * jnp.uint32(0x7FEB352D)
    x = x ^ (x >> 15)
    x = x * jnp.uint32(0x846CA68B)
    x = x ^ (x >> 16)
    return x


def _pe_dropout_kernel(seed_ref, x_ref, pe_ref, o_ref, *, p: float, training: bool):
    # x_ref: (ts, B, H); pe_ref: (ts, 1, H) -> broadcast add over batch (VPU).
    y = (x_ref[...] + pe_ref[...]).astype(jnp.float32)

    if training and p > 0.0:
        ts, B, H = x_ref.shape
        # Globally-unique element counter: blocks are independent and the result
        # is identical regardless of grid execution order (safe under "parallel").
        row = lax.broadcasted_iota(jnp.uint32, y.shape, 0)
        bat = lax.broadcasted_iota(jnp.uint32, y.shape, 1)
        col = lax.broadcasted_iota(jnp.uint32, y.shape, 2)
        base = pl.program_id(0).astype(jnp.uint32) * jnp.uint32(ts * B * H)
        ctr = base + row * jnp.uint32(B * H) + bat * jnp.uint32(H) + col
        seed = _hash_u32(seed_ref[0].astype(jnp.uint32) ^ jnp.uint32(0x9E3779B9))
        bits = _hash_u32(ctr ^ seed)
        # Uniform in [0, 1) from the top 24 bits (values fit exactly in f32).
        u = (bits >> 8).astype(jnp.int32).astype(jnp.float32) * jnp.float32(1.0 / (1 << 24))
        # nn.Dropout(p): keep with prob (1 - p), scale kept values by 1/(1 - p).
        keep = (u >= jnp.float32(p)).astype(jnp.float32)
        y = y * (keep * jnp.float32(1.0 / (1.0 - p)))   # one multiply, no select

    o_ref[...] = y.astype(o_ref.dtype)


def _choose_seq_tile(S: int, row_bytes: int, budget_bytes: int) -> int:
    """Largest divisor of S whose double-buffered block footprint fits the budget."""
    max_rows = max(1, budget_bytes // (2 * row_bytes))
    ts = 1
    for d in range(1, S + 1):
        if S % d == 0 and d <= max_rows:
            ts = d
    return ts


def positional_encoding_forward(x, pe_full, seed=0, *, p=DROPOUT_P,
                                training=True, tile_s=None, out_dtype=None):
    """Dropout(x + pe[:S]) with x: (S, B, H).  Mirrors the PyTorch module."""
    S, B, H = x.shape
    pe = pe_full[:S]                                   # (S, 1, H): the pe[:x.size(0), :] slice
    out_dtype = x.dtype if out_dtype is None else jnp.dtype(out_dtype)

    if tile_s is None:
        row_bytes = (B * H * x.dtype.itemsize          # x block, per seq row
                     + B * H * jnp.dtype(out_dtype).itemsize   # out block, per seq row
                     + H * pe.dtype.itemsize)          # pe block, per seq row
        tile_s = _choose_seq_tile(S, row_bytes, _VMEM_BUDGET_BYTES)
    ts = min(tile_s, S)
    assert S % ts == 0, "seq tile must divide the sequence length"

    seed_arr = jnp.asarray([seed], dtype=jnp.int32)
    kernel = functools.partial(_pe_dropout_kernel, p=float(p), training=bool(training))

    return pl.pallas_call(
        kernel,
        out_shape=jax.ShapeDtypeStruct((S, B, H), out_dtype),
        grid_spec=pltpu.PrefetchScalarGridSpec(
            num_scalar_prefetch=1,                      # seed lands in SMEM
            grid=(S // ts,),
            in_specs=[
                pl.BlockSpec((ts, B, H), lambda i, seed: (i, 0, 0)),
                pl.BlockSpec((ts, 1, H), lambda i, seed: (i, 0, 0)),
            ],
            out_specs=pl.BlockSpec((ts, B, H), lambda i, seed: (i, 0, 0)),
        ),
        compiler_params=pltpu.CompilerParams(
            # Blocks are independent (stateless hash per element), so the grid can
            # shard across both v7x TensorCores; neutral on single-TC v5e/v6e.
            dimension_semantics=("parallel",),
            vmem_limit_bytes=_VMEM_LIMIT_BYTES,
        ),
    )(seed_arr, x, pe)


if __name__ == "__main__":
    key = jax.random.PRNGKey(0)
    S, B, H = 8, 2, HIDDEN
    x = jax.random.normal(key, (S, B, H), dtype=jnp.float32)

    pe_full = build_pe(MAX_LEN, H)
    ref = x + pe_full[:S]

    # Eval-mode path (dropout is identity): exact x + pe[:S] semantics.
    y_eval = jax.block_until_ready(
        positional_encoding_forward(x, pe_full, seed=0, training=False))
    assert y_eval.shape == (S, B, H)
    assert jnp.allclose(y_eval, ref, atol=1e-6), "eval-mode mismatch vs reference"

    # Training-mode path (fused in-kernel dropout, stateless hash PRNG).
    y_train = jax.block_until_ready(
        positional_encoding_forward(x, pe_full, seed=1234, training=True))
    assert y_train.shape == (S, B, H)
    scale = 1.0 / (1.0 - DROPOUT_P)
    kept = y_train != 0.0
    # Kept elements equal (x + pe) / (1 - p); dropped elements are exactly zero.
    assert jnp.allclose(jnp.where(kept, y_train, ref * scale), ref * scale, atol=1e-5)
    drop_frac = float(1.0 - jnp.mean(kept.astype(jnp.float32)))
    assert 0.02 <= drop_frac <= 0.25, f"dropout rate {drop_frac} far from p={DROPOUT_P}"

    print("KERNEL_OK")
</pallas_src>

<mosaic_0001>
module attributes {stable_mosaic.version = 11 : i64} {
  func.func @_pe_dropout_kernel(%arg0: i32, %arg1: memref<1xi32, #tpu.memory_space<smem>>, %arg2: memref<8x2x256xf32, #tpu.memory_space<vmem>>, %arg3: memref<8x1x256xf32, #tpu.memory_space<vmem>>, %arg4: memref<8x2x256xf32, #tpu.memory_space<vmem>>) attributes {dimension_semantics = [#tpu.dimension_semantics<parallel>], iteration_bounds = array<i64: 1>, scalar_prefetch = 1 : i64, scratch_operands = 0 : i64, tpu.core_type = #tpu.core_type<tc>, window_params = [{transform_indices = @transform_0, window_bounds = array<i64: 8, 2, 256>}, {transform_indices = @transform_1, window_bounds = array<i64: 8, 1, 256>}, {transform_indices = @transform_2, window_bounds = array<i64: 8, 2, 256>}]} {
    %c0 = arith.constant 0 : index
    %c0_0 = arith.constant 0 : index
    %c0_1 = arith.constant 0 : index
    %0 = vector.load %arg2[%c0, %c0_0, %c0_1] : memref<8x2x256xf32, #tpu.memory_space<vmem>>, vector<8x2x256xf32>
    %c0_2 = arith.constant 0 : index
    %c0_3 = arith.constant 0 : index
    %c0_4 = arith.constant 0 : index
    %1 = vector.load %arg3[%c0_2, %c0_3, %c0_4] : memref<8x1x256xf32, #tpu.memory_space<vmem>>, vector<8x1x256xf32>
    %2 = vector.broadcast %1 : vector<8x1x256xf32> to vector<8x2x256xf32>
    %3 = arith.addf %0, %2 : vector<8x2x256xf32>
    %c0_5 = arith.constant 0 : index
    %c0_6 = arith.constant 0 : index
    %c0_7 = arith.constant 0 : index
    %4 = vector.load %arg4[%c0_5, %c0_6, %c0_7] : memref<8x2x256xf32, #tpu.memory_space<vmem>>, vector<8x2x256xf32>
    tpu.vector_store %arg4[%c0_5, %c0_6, %c0_7], %3 {strides = array<i32>} : memref<8x2x256xf32, #tpu.memory_space<vmem>>, vector<8x2x256xf32>,
    return
  }
  func.func @transform_0(%arg0: i32, %arg1: memref<1xi32, #tpu.memory_space<smem>>) -> (i32, i32, i32) {
    %c0_i32 = arith.constant 0 : i32
    %c0_i32_0 = arith.constant 0 : i32
    %c0_i32_1 = arith.constant 0 : i32
    return %arg0, %c0_i32, %c0_i32_0 : i32, i32, i32
  }
  func.func @transform_1(%arg0: i32, %arg1: memref<1xi32, #tpu.memory_space<smem>>) -> (i32, i32, i32) {
    %c0_i32 = arith.constant 0 : i32
    %c0_i32_0 = arith.constant 0 : i32
    %c0_i32_1 = arith.constant 0 : i32
    return %arg0, %c0_i32, %c0_i32_0 : i32, i32, i32
  }
  func.func @transform_2(%arg0: i32, %arg1: memref<1xi32, #tpu.memory_space<smem>>) -> (i32, i32, i32) {
    %c0_i32 = arith.constant 0 : i32
    %c0_i32_0 = arith.constant 0 : i32
    %c0_i32_1 = arith.constant 0 : i32
    return %arg0, %c0_i32, %c0_i32_0 : i32, i32, i32
  }
}

</mosaic_0001>

<llo_original>
// kernel: tpu_custom_call.1
$region0: #{tpu_custom_call.1}
  #allocation0 [shape = 'u32[]', space=smem, size = 0x4, offset = 0x4, fixed_abs, tag = 'smem constant byte address 0x4 - core index']
  #allocation1 [shape = 'u32[144,128]{1,0:T(1,128)}', space=vmem, size = 0x12000, scoped, tag = 'internal scratch']
  #allocation2 [shape = 's32[1]{0}', space=sflag, size = 0x4, scoped, tag = 'scoped memory for tpu_custom_call.1']
  #allocation3 [shape = 's32[1]{0:T(128)S(6)}', space=smem, size = 0x200, scoped, tag = 'prefetched SMEM operand 0']
  %s0 = inlined_call_operand.<no memory space> [shape: s32[1], index: 0, kind: input, shape index: {}]
  %s1 = inlined_call_operand.hbm [shape: f32[8,2,256], index: 1, kind: input, shape index: {}]
  %s2 = inlined_call_operand.hbm [shape: f32[8,1,256], index: 2, kind: input, shape index: {}]
  %s3 = inlined_call_operand.hbm [shape: f32[8,2,256], index: 3, kind: output, shape index: {}]
  %s4 = sld [smem:[#allocation0]]
  $region26: #{tpu_custom_call.1} parent=0
    _
  %s6 = ssub.s32 1, %s4
  %s7 = scalar_select 0, %s6, %s4
  %8 = sst [smem:[#allocation3]] %s0
  $region1: #{tpu_custom_call.1} parent=0
    #allocation4 [shape = 'u8[16384]{0}', space=vmem, size = 0x4000, scoped, tag = 'input window, operand 1, single buffered']
    #allocation5 [shape = 's32[1]{0}', space=sflag, size = 0x4, scoped, tag = 'scoped memory for tpu_custom_call.1']
    #allocation6 [shape = 's32[1]{0}', space=sflag, size = 0x4, scoped, tag = 'scoped memory for tpu_custom_call.1']
    #allocation7 [shape = 'u8[8192]{0}', space=vmem, size = 0x2000, scoped, tag = 'input window, operand 2, single buffered']
    #allocation8 [shape = 's32[1]{0}', space=sflag, size = 0x4, scoped, tag = 'scoped memory for tpu_custom_call.1']
    #allocation9 [shape = 'u8[16384]{0}', space=vmem, size = 0x4000, scoped, tag = 'output window, operand 0, single buffered']
    %9 = vsyncpa [#allocation5], 0
    %10 = vsyncpa [#allocation8], 0
    %11 = vsyncpa [#allocation6], 0
    // Predicated region
    $region2: #{tpu_custom_call.1} parent=1 // pred_check
      _
    $region3: #{tpu_custom_call.1} parent=1 // pred_check_branch
      %13 = sbr.rel (0) target = $region5
    $region4: #{tpu_custom_call.1} parent=1 // pred_region
      %s15 = ssub.s32 512, 512
      %16 = vsyncadd [#allocation5], %s15
      %s17 = sshll.u32 [#allocation4], 4
      %s18 = int_to_ptr.vmem [resolvable:$true] %s17
      %23 = dma.hbm_to_vmem [thread:$0]  %s1, 512, %s18, [#allocation5], 64, 64, 4
    $region5: #{tpu_custom_call.1} parent=1 // pred_fallthru
      _
    // Predicated region
    $region6: #{tpu_custom_call.1} parent=1 // pred_check
      _
    $region7: #{tpu_custom_call.1} parent=1 // pred_check_branch
      %25 = sbr.rel (0) target = $region9
    $region8: #{tpu_custom_call.1} parent=1 // pred_region
      %s27 = ssub.s32 256, 256
      %28 = vsyncadd [#allocation8], %s27
      %s29 = sshll.u32 [#allocation7], 4
      %s30 = int_to_ptr.vmem [resolvable:$true] %s29
      %35 = dma.hbm_to_vmem [thread:$0]  %s2, 256, %s30, [#allocation8], 32, 32, 2
    $region9: #{tpu_custom_call.1} parent=1 // pred_fallthru
      _
    // Predicated region
    $region10: #{tpu_custom_call.1} parent=1 // pred_check
      _
    $region11: #{tpu_custom_call.1} parent=1 // pred_check_branch
      %37 = sbr.rel (0) target = $region13
    $region12: #{tpu_custom_call.1} parent=1 // pred_region
      %38 = dma.done [#allocation5], 512
    $region13: #{tpu_custom_call.1} parent=1 // pred_fallthru
      _
    // Predicated region
    $region14: #{tpu_custom_call.1} parent=1 // pred_check
      _
    $region15: #{tpu_custom_call.1} parent=1 // pred_check_branch
      %40 = sbr.rel (0) target = $region17
    $region16: #{tpu_custom_call.1} parent=1 // pred_region
      %41 = dma.done [#allocation8], 256
    $region17: #{tpu_custom_call.1} parent=1 // pred_fallthru
      _
    %v42 = vld [vmem:[#allocation4] sm:$0xf]
    %v43 = vld [vmem:[#allocation4 + $0x4] sm:$0xf]
    %v44 = vld [vmem:[#allocation4 + $0x8] sm:$0xf]
    %v45 = vld [vmem:[#allocation4 + $0xc] sm:$0xf]
    %v46 = vld [vmem:[#allocation4 + $0x10] sm:$0xf]
    %v47 = vld [vmem:[#allocation4 + $0x14] sm:$0xf]
    %v48 = vld [vmem:[#allocation4 + $0x18] sm:$0xf]
    %v49 = vld [vmem:[#allocation4 + $0x1c] sm:$0xf]
    %v50 = vld [vmem:[#allocation7] sm:$0x3]
    %v51 = vld [vmem:[#allocation7 + $0x2] sm:$0x3]
    %v52 = vld [vmem:[#allocation7 + $0x4] sm:$0x3]
    %v53 = vld [vmem:[#allocation7 + $0x6] sm:$0x3]
    %v54 = vld [vmem:[#allocation7 + $0x8] sm:$0x3]
    %v55 = vld [vmem:[#allocation7 + $0xa] sm:$0x3]
    %v56 = vld [vmem:[#allocation7 + $0xc] sm:$0x3]
    %v57 = vld [vmem:[#allocation7 + $0xe] sm:$0x3]
    %v66 = vlaneseq
    %v67 = vshrl.u32 %v66, 7
    %v68 = vsub.s32 0, %v67
    %v69 = vrot.slane %v50, %v68
    %v70 = vlaneseq
    %v71 = vshrl.u32 %v70, 7
    %v72 = vsub.s32 1, %v71
    %v73 = vrot.slane %v50, %v72
    %v74 = vlaneseq
    %v75 = vshrl.u32 %v74, 7
    %v76 = vsub.s32 0, %v75
    %v77 = vrot.slane %v51, %v76
    %v78 = vlaneseq
    %v79 = vshrl.u32 %v78, 7
    %v80 = vsub.s32 1, %v79
    %v81 = vrot.slane %v51, %v80
    %v82 = vlaneseq
    %v83 = vshrl.u32 %v82, 7
    %v84 = vsub.s32 0, %v83
    %v85 = vrot.slane %v52, %v84
    %v86 = vlaneseq
    %v87 = vshrl.u32 %v86, 7
    %v88 = vsub.s32 1, %v87
    %v89 = vrot.slane %v52, %v88
    %v90 = vlaneseq
    %v91 = vshrl.u32 %v90, 7
    %v92 = vsub.s32 0, %v91
    %v93 = vrot.slane %v53, %v92
    %v94 = vlaneseq
    %v95 = vshrl.u32 %v94, 7
    %v96 = vsub.s32 1, %v95
    %v97 = vrot.slane %v53, %v96
    %v98 = vlaneseq
    %v99 = vshrl.u32 %v98, 7
    %v100 = vsub.s32 0, %v99
    %v101 = vrot.slane %v54, %v100
    %v102 = vlaneseq
    %v103 = vshrl.u32 %v102, 7
    %v104 = vsub.s32 1, %v103
    %v105 = vrot.slane %v54, %v104
    %v106 = vlaneseq
    %v107 = vshrl.u32 %v106, 7
    %v108 = vsub.s32 0, %v107
    %v109 = vrot.slane %v55, %v108
    %v110 = vlaneseq
    %v111 = vshrl.u32 %v110, 7
    %v112 = vsub.s32 1, %v111
    %v113 = vrot.slane %v55, %v112
    %v114 = vlaneseq
    %v115 = vshrl.u32 %v114, 7
    %v116 = vsub.s32 0, %v115
    %v117 = vrot.slane %v56, %v116
    %v118 = vlaneseq
    %v119 = vshrl.u32 %v118, 7
    %v120 = vsub.s32 1, %v119
    %v121 = vrot.slane %v56, %v120
    %v122 = vlaneseq
    %v123 = vshrl.u32 %v122, 7
    %v124 = vsub.s32 0, %v123
    %v125 = vrot.slane %v57, %v124
    %v126 = vlaneseq
    %v127 = vshrl.u32 %v126, 7
    %v128 = vsub.s32 1, %v127
    %v129 = vrot.slane %v57, %v128
    %v130 = vcombine.low %v69, %v73
    %v132 = vunpack.c.l.s4 1983009808
    %v133 = vunpack.c.0.s8 %v132
    %v134 = vlaneseq
    %v135 = vshrl.u32 %v134, 7
    %v136 = vsub.s32 %v133, %v135
    %v137 = vrot.slane %v130, %v136
    %v138 = vcombine.low %v77, %v81
    %v140 = vunpack.c.l.s4 1983009808
    %v141 = vunpack.c.0.s8 %v140
    %v142 = vlaneseq
    %v143 = vshrl.u32 %v142, 7
    %v144 = vsub.s32 %v141, %v143
    %v145 = vrot.slane %v138, %v144
    %v146 = vcombine.low %v85, %v89
    %v148 = vunpack.c.l.s4 1983009808
    %v149 = vunpack.c.0.s8 %v148
    %v150 = vlaneseq
    %v151 = vshrl.u32 %v150, 7
    %v152 = vsub.s32 %v149, %v151
    %v153 = vrot.slane %v146, %v152
    %v154 = vcombine.low %v93, %v97
    %v156 = vunpack.c.l.s4 1983009808
    %v157 = vunpack.c.0.s8 %v156
    %v158 = vlaneseq
    %v159 = vshrl.u32 %v158, 7
    %v160 = vsub.s32 %v157, %v159
    %v161 = vrot.slane %v154, %v160
    %v162 = vcombine.low %v101, %v105
    %v164 = vunpack.c.l.s4 1983009808
    %v165 = vunpack.c.0.s8 %v164
    %v166 = vlaneseq
    %v167 = vshrl.u32 %v166, 7
    %v168 = vsub.s32 %v165, %v167
    %v169 = vrot.slane %v162, %v168
    %v170 = vcombine.low %v109, %v113
    %v172 = vunpack.c.l.s4 1983009808
    %v173 = vunpack.c.0.s8 %v172
    %v174 = vlaneseq
    %v175 = vshrl.u32 %v174, 7
    %v176 = vsub.s32 %v173, %v175
    %v177 = vrot.slane %v170, %v176
    %v178 = vcombine.low %v117, %v121
    %v180 = vunpack.c.l.s4 1983009808
    %v181 = vunpack.c.0.s8 %v180
    %v182 = vlaneseq
    %v183 = vshrl.u32 %v182, 7
    %v184 = vsub.s32 %v181, %v183
    %v185 = vrot.slane %v178, %v184
    %v186 = vcombine.low %v125, %v129
    %v188 = vunpack.c.l.s4 1983009808
    %v189 = vunpack.c.0.s8 %v188
    %v190 = vlaneseq
    %v191 = vshrl.u32 %v190, 7
    %v192 = vsub.s32 %v189, %v191
    %v193 = vrot.slane %v186, %v192
    %v202 = vadd.f32 %v42, %v137
    %v203 = vadd.f32 %v43, %v145
    %v204 = vadd.f32 %v44, %v153
    %v205 = vadd.f32 %v45, %v161
    %v206 = vadd.f32 %v46, %v169
    %v207 = vadd.f32 %v47, %v177
    %v208 = vadd.f32 %v48, %v185
    %v209 = vadd.f32 %v49, %v193
    %210 = vst [vmem:[#allocation9] sm:$0xf] %v202
    %211 = vst [vmem:[#allocation9 + $0x4] sm:$0xf] %v203
    %212 = vst [vmem:[#allocation9 + $0x8] sm:$0xf] %v204
    %213 = vst [vmem:[#allocation9 + $0xc] sm:$0xf] %v205
    %214 = vst [vmem:[#allocation9 + $0x10] sm:$0xf] %v206
    %215 = vst [vmem:[#allocation9 + $0x14] sm:$0xf] %v207
    %216 = vst [vmem:[#allocation9 + $0x18] sm:$0xf] %v208
    %217 = vst [vmem:[#allocation9 + $0x1c] sm:$0xf] %v209
    // Predicated region
    $region18: #{tpu_custom_call.1} parent=1 // pred_check
      _
    $region19: #{tpu_custom_call.1} parent=1 // pred_check_branch
      %219 = sbr.rel (0) target = $region21
    $region20: #{tpu_custom_call.1} parent=1 // pred_region
      %s221 = ssub.s32 512, 512
      %222 = vsyncadd [#allocation6], %s221
      %s223 = sshll.u32 [#allocation9], 4
      %s224 = int_to_ptr.vmem [resolvable:$true] %s223
      %229 = dma.vmem_to_hbm [thread:$0]  %s224, 512, %s3, [#allocation6], 64, 64, 4
    $region21: #{tpu_custom_call.1} parent=1 // pred_fallthru
      _
    // Predicated region
    $region22: #{tpu_custom_call.1} parent=1 // pred_check
      _
    $region23: #{tpu_custom_call.1} parent=1 // pred_check_branch
      %231 = sbr.rel (0) target = $region25
    $region24: #{tpu_custom_call.1} parent=1 // pred_region
      %232 = dma.done [#allocation6], 512
    $region25: #{tpu_custom_call.1} parent=1 // pred_fallthru
      _
    %233 = vsyncpa [#allocation5], 1
    %234 = vsyncpa [#allocation8], 1
    %235 = vsyncpa [#allocation6], 1

</llo_original>
